<compile_context>
chip_gen: v7x
topology: tpu7x:2x2x1
jax: 0.10.0
libtpu: 0.0.40
codegen_flags: <defaults>
</compile_context>

<pallas_src>
import jax
import jax.numpy as jnp
from jax import lax
from jax.experimental import pallas as pl
from jax.experimental.pallas import tpu as pltpu


def _round_up(x, m):
    return (x + m - 1) // m * m


def _pick_tile(dim, pref, granule):
    """Tile size: multiple of `granule`, <= pref, dividing the padded dim."""
    padded = _round_up(dim, granule)
    tile = min(pref, padded)
    padded = _round_up(dim, tile)
    return tile, padded


def _pick_row_tile(dim, pref, granule):
    """Row tile: like _pick_tile but prefers >=2 grid steps (v7x megacore)."""
    tile, padded = _pick_tile(dim, pref, granule)
    if padded // tile < 2 and tile % (2 * granule) == 0:
        tile //= 2
        padded = _round_up(dim, tile)
    return tile, padded


def _compiler_params(semantics, block_bytes, scratch_bytes=0):
    """Dimension semantics + a VMEM budget derived from the block footprint.

    Roughly 2 pipeline buffers per block + scratch + headroom; floored at the
    usual 32 MiB scoped default and capped at 64 MiB so the request stays
    inside v7x's physical VMEM.  Re-derive tiles if the estimate nears the cap.
    """
    need = 2 * block_bytes + scratch_bytes + (4 << 20)
    limit = int(min(max(need, 32 << 20), 64 << 20))
    return pltpu.CompilerParams(dimension_semantics=semantics,
                                vmem_limit_bytes=limit)


# ---------------- Pallas kernels ----------------

def _linear1_tanh_kernel(tab_ref, w1_ref, b1_ref, act_ref, acc_ref):
    """act = tanh(table @ w1 + b1); kv_in is the reduction (last grid) axis."""
    k = pl.program_id(2)

    @pl.when(k == 0)
    def _():
        acc_ref[...] = jnp.zeros_like(acc_ref)

    # bf16 x bf16 on the MXU, f32 accumulation.
    acc_ref[...] += jnp.dot(tab_ref[...], w1_ref[...],
                            preferred_element_type=jnp.float32)

    @pl.when(k == pl.num_programs(2) - 1)
    def _():
        # Bias + tanh in f32 (v5e has no bf16 VPU/EUP); store bf16 for kernel B.
        act_ref[...] = jnp.tanh(acc_ref[...] + b1_ref[...]).astype(act_ref.dtype)


def _linear2_kernel(act_ref, w2_ref, b2_ref, out_ref):
    """out = act @ w2 + b2, accumulated directly into the f32 out_ref.

    The out block index (i, j) is constant over the hidden (last, "arbitrary")
    grid axis, so the block stays VMEM-resident across the reduction and no
    extra accumulator scratch / final copy is needed.
    """
    h = pl.program_id(2)

    @pl.when(h == 0)
    def _():
        out_ref[...] = jnp.zeros_like(out_ref)

    out_ref[...] += jnp.dot(act_ref[...], w2_ref[...],
                            preferred_element_type=jnp.float32)

    @pl.when(h == pl.num_programs(2) - 1)
    def _():
        out_ref[...] += b2_ref[...]


def _gather_rows_kernel(idx_ref, tab_ref, out_ref):
    """Gather TG table rows per grid step via a one-hot MXU matmul."""
    ids = idx_ref[...]                                      # (TG, 1) int32
    tg = ids.shape[0]
    p_pad = tab_ref.shape[0]
    # One-hot built in the table's dtype (bf16/f32 one-hot is exact) so the
    # table block is fed to the MXU without an f32 copy.
    onehot = (ids == lax.broadcasted_iota(jnp.int32, (tg, p_pad), 1)
              ).astype(tab_ref.dtype)                       # (TG, P_pad)
    rows = jnp.dot(onehot, tab_ref[...],
                   preferred_element_type=jnp.float32)      # (TG, kv_pad) f32
    out_ref[...] = rows.astype(out_ref.dtype)


# ---------------- one-time parameter preparation (hoisted out of forward) ----

def prepare_projection_params(embedding, w1, b1, w2, b2,
                              row_tile=128, hidden_tile=512, kv_tile=512):
    """Pre-pad + bf16-cast the PrefixEncoder weights once at init.

    `w1`/`w2` are expected pre-transposed to (in, out) layout, i.e. torch's
    `linear.weight.T`, so the kernels compute x @ W + b.
    """
    P, kv = embedding.shape
    hidden = w1.shape[1]

    # Row granule 16 (bf16 sublane packing); hidden/kv tiles are kept at
    # multiples of 256 when the dims allow (v6e/v7x MXU is 256-wide).
    tm, p_pad = _pick_row_tile(P, row_tile, 16)
    th, hid_pad = _pick_tile(hidden, hidden_tile, 128)
    tkv, kv_pad = _pick_tile(kv, kv_tile, 128)

    tab = jnp.pad(embedding.astype(jnp.bfloat16),
                  ((0, p_pad - P), (0, kv_pad - kv)))
    w1p = jnp.pad(w1.astype(jnp.bfloat16),
                  ((0, kv_pad - kv), (0, hid_pad - hidden)))
    b1p = jnp.pad(jnp.reshape(b1, (1, -1)).astype(jnp.float32),
                  ((0, 0), (0, hid_pad - hidden)))
    w2p = jnp.pad(w2.astype(jnp.bfloat16),
                  ((0, hid_pad - hidden), (0, kv_pad - kv)))
    b2p = jnp.pad(jnp.reshape(b2, (1, -1)).astype(jnp.float32),
                  ((0, 0), (0, kv_pad - kv)))

    meta = dict(P=P, kv=kv, hidden=hidden, tm=tm, th=th, tkv=tkv,
                p_pad=p_pad, hid_pad=hid_pad, kv_pad=kv_pad)
    return dict(tab=tab, w1=w1p, b1=b1p, w2=w2p, b2=b2p, meta=meta)


def prepare_embedding_table(embedding):
    """Pre-pad the embedding table once for the no-projection path."""
    P, kv = embedding.shape
    granule = 16 if jnp.dtype(embedding.dtype).itemsize <= 2 else 8
    p_pad = _round_up(P, granule)
    kv_pad = _round_up(kv, 128)
    tab = jnp.pad(embedding, ((0, p_pad - P), (0, kv_pad - kv)))
    return dict(tab=tab, P=P, kv=kv)


# ---------------- Pallas wrappers ----------------

def _transform_table(params):
    """Linear2(tanh(Linear1(table))) over every (padded) embedding-table row."""
    m = params["meta"]
    tm, th, tkv = m["tm"], m["th"], m["tkv"]
    p_pad, hid_pad, kv_pad = m["p_pad"], m["hid_pad"], m["kv_pad"]

    # ---- Kernel A: act = tanh(table @ w1 + b1) ----
    grid_a = (p_pad // tm, hid_pad // th, kv_pad // tkv)
    bytes_a = tm * tkv * 2 + tkv * th * 2 + th * 4 + tm * th * 2
    act = pl.pallas_call(
        _linear1_tanh_kernel,
        out_shape=jax.ShapeDtypeStruct((p_pad, hid_pad), jnp.bfloat16),
        grid_spec=pltpu.PrefetchScalarGridSpec(
            num_scalar_prefetch=0,
            grid=grid_a,
            in_specs=[
                pl.BlockSpec((tm, tkv), lambda i, h, k: (i, k)),   # table rows
                pl.BlockSpec((tkv, th), lambda i, h, k: (k, h)),   # w1 tile
                pl.BlockSpec((1, th), lambda i, h, k: (0, h)),     # b1 tile
            ],
            out_specs=pl.BlockSpec((tm, th), lambda i, h, k: (i, h)),
            scratch_shapes=[pltpu.VMEM((tm, th), jnp.float32)],
        ),
        compiler_params=_compiler_params(
            ("parallel", "parallel", "arbitrary"), bytes_a,
            scratch_bytes=tm * th * 4),
    )(params["tab"], params["w1"], params["b1"])

    # ---- Kernel B: out = act @ w2 + b2 (direct out_ref accumulation) ----
    grid_b = (p_pad // tm, kv_pad // tkv, hid_pad // th)
    bytes_b = tm * th * 2 + th * tkv * 2 + tkv * 4 + tm * tkv * 4
    out = pl.pallas_call(
        _linear2_kernel,
        out_shape=jax.ShapeDtypeStruct((p_pad, kv_pad), jnp.float32),
        grid_spec=pltpu.PrefetchScalarGridSpec(
            num_scalar_prefetch=0,
            grid=grid_b,
            in_specs=[
                pl.BlockSpec((tm, th), lambda i, j, h: (i, h)),    # activation
                pl.BlockSpec((th, tkv), lambda i, j, h: (h, j)),   # w2 tile
                pl.BlockSpec((1, tkv), lambda i, j, h: (0, j)),    # b2 tile
            ],
            out_specs=pl.BlockSpec((tm, tkv), lambda i, j, h: (i, j)),
        ),
        compiler_params=_compiler_params(
            ("parallel", "parallel", "arbitrary"), bytes_b),
    )(act, params["w2"], params["b2"])
    return out


def _gather_rows(indices, table, out_dtype, row_tile=128):
    """indices: (n,) int32; table: (P_pad, kv_pad). Returns (n_pad, kv_pad)."""
    n = indices.shape[0]
    p_pad, kv_pad = table.shape
    # Sublane granule 16 for 16-bit outputs (bf16 packing), 8 for f32.
    sub = 16 if jnp.dtype(out_dtype).itemsize <= 2 else 8
    tg = min(row_tile, _round_up(n, sub))
    n_pad = _round_up(n, tg)
    if n_pad // tg < 2 and tg % (2 * sub) == 0:   # give megacore >=2 steps
        tg //= 2
        n_pad = _round_up(n, tg)
    idx2d = jnp.pad(indices.astype(jnp.int32), (0, n_pad - n)).reshape(n_pad, 1)

    grid_spec = pltpu.PrefetchScalarGridSpec(
        num_scalar_prefetch=0,
        grid=(n_pad // tg,),
        in_specs=[
            pl.BlockSpec((tg, 1), lambda i: (i, 0)),
            # Table block index never changes -> single-buffer it (saves VMEM).
            pl.BlockSpec((p_pad, kv_pad), lambda i: (0, 0),
                         pipeline_mode=pl.Buffered(1)),
        ],
        out_specs=pl.BlockSpec((tg, kv_pad), lambda i: (i, 0)),
    )
    block_bytes = (tg * 4
                   + p_pad * kv_pad * jnp.dtype(table.dtype).itemsize
                   + tg * kv_pad * jnp.dtype(out_dtype).itemsize)
    return pl.pallas_call(
        _gather_rows_kernel,
        out_shape=jax.ShapeDtypeStruct((n_pad, kv_pad), out_dtype),
        grid_spec=grid_spec,
        compiler_params=_compiler_params(("parallel",), block_bytes),
    )(idx2d, table)


# ---------------- forward passes ----------------

def prefix_encoder_projection(prefix, params):
    """prefix_projection=True path.  prefix: (B, L) int32 -> (B, L, kv) f32.

    NOTE: padded table rows (ids >= pre_seq_len) hold tanh(b1) @ w2 + b2
    garbage; as with torch nn.Embedding, all prefix ids must be < pre_seq_len.
    """
    m = params["meta"]
    B, L = prefix.shape
    trans_tab = _transform_table(params)                    # (p_pad, kv_pad) f32
    idx_flat = prefix.reshape(B * L).astype(jnp.int32)
    out = _gather_rows(idx_flat, trans_tab, jnp.float32)
    return out[:B * L, :m["kv"]].reshape(B, L, m["kv"])


def prefix_encoder_no_projection(prefix, table_params):
    """prefix_projection=False path: pure embedding lookup (exact)."""
    B, L = prefix.shape
    tab = table_params["tab"]
    kv = table_params["kv"]
    idx_flat = prefix.reshape(B * L).astype(jnp.int32)
    out = _gather_rows(idx_flat, tab, tab.dtype)
    return out[:B * L, :kv].reshape(B, L, kv)


# ---------------- pure-JAX references ----------------

def ref_projection(prefix, embedding, w1, b1, w2, b2):
    tok = jnp.take(embedding, prefix, axis=0)               # (B, L, kv)
    h = jnp.tanh(tok @ w1 + jnp.reshape(b1, (-1,)))
    return h @ w2 + jnp.reshape(b2, (-1,))


def ref_no_projection(prefix, embedding):
    return jnp.take(embedding, prefix, axis=0)


# ---------------- main ----------------

if __name__ == "__main__":
    # Small synthetic ChatGLM-like config:
    #   num_layers=2, kv_channels=32, multi_query_group_num=1 -> kv_size = 128
    num_layers = 2
    kv_channels = 32
    multi_query_group_num = 1
    kv_size = num_layers * kv_channels * multi_query_group_num * 2   # 128
    hidden_size = 128
    pre_seq_len = 8
    batch = 2
    prefix_len = 8

    key = jax.random.PRNGKey(0)
    k_emb, k_w1, k_b1, k_w2, k_b2, k_idx = jax.random.split(key, 6)

    embedding = jax.random.normal(k_emb, (pre_seq_len, kv_size), jnp.float32)
    # torch Linear(kv, hidden) stores weight as (hidden, kv); here pre-transposed
    # to (kv, hidden) so kernels compute x @ W + b.
    w1 = jax.random.normal(k_w1, (kv_size, hidden_size), jnp.float32) * 0.05
    b1 = jax.random.normal(k_b1, (1, hidden_size), jnp.float32) * 0.05
    w2 = jax.random.normal(k_w2, (hidden_size, kv_size), jnp.float32) * 0.05
    b2 = jax.random.normal(k_b2, (1, kv_size), jnp.float32) * 0.05

    prefix = jax.random.randint(k_idx, (batch, prefix_len), 0, pre_seq_len,
                                dtype=jnp.int32)

    # --- prefix_projection = True ---
    proj_params = prepare_projection_params(embedding, w1, b1, w2, b2)
    out_proj = prefix_encoder_projection(prefix, proj_params)
    out_proj = jax.block_until_ready(out_proj)
    ref_proj = ref_projection(prefix, embedding, w1, b1, w2, b2)
    assert out_proj.shape == (batch, prefix_len, kv_size)
    max_err = float(jnp.max(jnp.abs(out_proj - ref_proj)))
    # bf16 weights on the MXU -> ~1e-2-scale error vs. the pure-f32 reference.
    assert jnp.allclose(out_proj, ref_proj, atol=3e-2, rtol=3e-2), (
        f"projection mismatch, max abs err = {max_err}")

    # --- prefix_projection = False (bf16 table; lookup must be exact) ---
    emb_bf16 = embedding.astype(jnp.bfloat16)
    emb_params = prepare_embedding_table(emb_bf16)
    out_emb = prefix_encoder_no_projection(prefix, emb_params)
    out_emb = jax.block_until_ready(out_emb)
    ref_emb = ref_no_projection(prefix, emb_bf16)
    assert out_emb.shape == (batch, prefix_len, kv_size)
    assert out_emb.dtype == jnp.bfloat16
    assert jnp.array_equal(out_emb, ref_emb)

    print("KERNEL_OK")
</pallas_src>

<mosaic_0001>
module attributes {stable_mosaic.version = 11 : i64} {
  func.func @_linear1_tanh_kernel(%arg0: i32, %arg1: i32, %arg2: i32, %arg3: memref<16x128xbf16, #tpu.memory_space<vmem>>, %arg4: memref<128x128xbf16, #tpu.memory_space<vmem>>, %arg5: memref<1x128xf32, #tpu.memory_space<vmem>>, %arg6: memref<16x128xbf16, #tpu.memory_space<vmem>>, %arg7: memref<16x128xf32, #tpu.memory_space<vmem>>) attributes {dimension_semantics = [#tpu.dimension_semantics<parallel>, #tpu.dimension_semantics<parallel>, #tpu.dimension_semantics<arbitrary>], iteration_bounds = array<i64: 1, 1, 1>, scalar_prefetch = 0 : i64, scratch_operands = 1 : i64, tpu.core_type = #tpu.core_type<tc>, window_params = [{transform_indices = @transform_0, window_bounds = array<i64: 16, 128>}, {transform_indices = @transform_1, window_bounds = array<i64: 128, 128>}, {transform_indices = @transform_2, window_bounds = array<i64: 1, 128>}, {transform_indices = @transform_3, window_bounds = array<i64: 16, 128>}]} {
    %c0_i32 = arith.constant 0 : i32
    %0 = arith.cmpi eq, %arg2, %c0_i32 : i32
    %1 = arith.extui %0 : i1 to i32
    %c0_i32_0 = arith.constant 0 : i32
    %2 = arith.cmpi ne, %1, %c0_i32_0 : i32
    scf.if %2 {
      %cst_10 = arith.constant 0.000000e+00 : f32
      %12 = vector.broadcast %cst_10 : f32 to vector<16x128xf32>
      %c0_11 = arith.constant 0 : index
      %c0_12 = arith.constant 0 : index
      %13 = vector.load %arg7[%c0_11, %c0_12] : memref<16x128xf32, #tpu.memory_space<vmem>>, vector<16x128xf32>
      tpu.vector_store %arg7[%c0_11, %c0_12], %12 {strides = array<i32>} : memref<16x128xf32, #tpu.memory_space<vmem>>, vector<16x128xf32>,
    } else {
    }
    %c0 = arith.constant 0 : index
    %c0_1 = arith.constant 0 : index
    %3 = vector.load %arg7[%c0, %c0_1] : memref<16x128xf32, #tpu.memory_space<vmem>>, vector<16x128xf32>
    %c0_2 = arith.constant 0 : index
    %c0_3 = arith.constant 0 : index
    %4 = vector.load %arg3[%c0_2, %c0_3] : memref<16x128xbf16, #tpu.memory_space<vmem>>, vector<16x128xbf16>
    %c0_4 = arith.constant 0 : index
    %c0_5 = arith.constant 0 : index
    %5 = vector.load %arg4[%c0_4, %c0_5] : memref<128x128xbf16, #tpu.memory_space<vmem>>, vector<128x128xbf16>
    %cst = arith.constant dense<0.000000e+00> : vector<16x128xf32>
    %6 = tpu.matmul %4, %5, %cst {dimension_numbers = #tpu.dot_dimension_numbers<[1], [0], [0], [1], [0, 0, 1, 1], [], []>} : vector<16x128xbf16>, vector<128x128xbf16>, vector<16x128xf32> -> vector<16x128xf32>
    %7 = arith.addf %3, %6 : vector<16x128xf32>
    %c0_6 = arith.constant 0 : index
    %c0_7 = arith.constant 0 : index
    %8 = vector.load %arg7[%c0_6, %c0_7] : memref<16x128xf32, #tpu.memory_space<vmem>>, vector<16x128xf32>
    tpu.vector_store %arg7[%c0_6, %c0_7], %7 {strides = array<i32>} : memref<16x128xf32, #tpu.memory_space<vmem>>, vector<16x128xf32>,
    %c0_i32_8 = arith.constant 0 : i32
    %9 = arith.cmpi eq, %arg2, %c0_i32_8 : i32
    %10 = arith.extui %9 : i1 to i32
    %c0_i32_9 = arith.constant 0 : i32
    %11 = arith.cmpi ne, %10, %c0_i32_9 : i32
    scf.if %11 {
      %c0_10 = arith.constant 0 : index
      %c0_11 = arith.constant 0 : index
      %12 = vector.load %arg7[%c0_10, %c0_11] : memref<16x128xf32, #tpu.memory_space<vmem>>, vector<16x128xf32>
      %c0_12 = arith.constant 0 : index
      %c0_13 = arith.constant 0 : index
      %13 = vector.load %arg5[%c0_12, %c0_13] : memref<1x128xf32, #tpu.memory_space<vmem>>, vector<1x128xf32>
      %14 = vector.broadcast %13 : vector<1x128xf32> to vector<16x128xf32>
      %15 = arith.addf %12, %14 : vector<16x128xf32>
      %16 = math.tanh %15 : vector<16x128xf32>
      %17 = arith.truncf %16 : vector<16x128xf32> to vector<16x128xbf16>
      %c0_14 = arith.constant 0 : index
      %c0_15 = arith.constant 0 : index
      %18 = vector.load %arg6[%c0_14, %c0_15] : memref<16x128xbf16, #tpu.memory_space<vmem>>, vector<16x128xbf16>
      tpu.vector_store %arg6[%c0_14, %c0_15], %17 {strides = array<i32>} : memref<16x128xbf16, #tpu.memory_space<vmem>>, vector<16x128xbf16>,
    } else {
    }
    return
  }
  func.func @transform_0(%arg0: i32, %arg1: i32, %arg2: i32) -> (i32, i32) {
    %c0_i32 = arith.constant 0 : i32
    return %arg0, %arg2 : i32, i32
  }
  func.func @transform_1(%arg0: i32, %arg1: i32, %arg2: i32) -> (i32, i32) {
    %c0_i32 = arith.constant 0 : i32
    return %arg2, %arg1 : i32, i32
  }
  func.func @transform_2(%arg0: i32, %arg1: i32, %arg2: i32) -> (i32, i32) {
    %c0_i32 = arith.constant 0 : i32
    %c0_i32_0 = arith.constant 0 : i32
    return %c0_i32, %arg1 : i32, i32
  }
  func.func @transform_3(%arg0: i32, %arg1: i32, %arg2: i32) -> (i32, i32) {
    %c0_i32 = arith.constant 0 : i32
    return %arg0, %arg1 : i32, i32
  }
}

</mosaic_0001>

<llo_original>
// kernel: tpu_custom_call.1
$region0: #{tpu_custom_call.1}
  #allocation0 [shape = 'u32[]', space=smem, size = 0x4, offset = 0x4, fixed_abs, tag = 'smem constant byte address 0x4 - core index']
  #allocation1 [shape = 'u32[144,128]{1,0:T(1,128)}', space=vmem, size = 0x12000, scoped, tag = 'internal scratch']
  #allocation2 [shape = 'f32[16,128]{1,0:T(8,128)}', space=vmem, size = 0x2000, scoped, tag = 'scratch operand']
  %s0 = inlined_call_operand.hbm [shape: bf16[16,128], index: 0, kind: input, shape index: {}]
  %s1 = inlined_call_operand.hbm [shape: bf16[128,128], index: 1, kind: input, shape index: {}]
  %s2 = inlined_call_operand.vmem [shape: f32[1,128], index: 2, kind: input, shape index: {}]
  %s3 = inlined_call_operand.hbm [shape: bf16[16,128], index: 3, kind: output, shape index: {}]
  %s4 = sld [smem:[#allocation0]]
  $region38: #{tpu_custom_call.1} parent=0
    _
  %s6 = ssub.s32 1, %s4
  %s7 = scalar_select 0, %s6, %s4
  $region1: #{tpu_custom_call.1} parent=0
    #allocation3 [shape = 'u8[4096]{0}', space=vmem, size = 0x1000, scoped, tag = 'input window, operand 0, single buffered']
    #allocation4 [shape = 's32[1]{0}', space=sflag, size = 0x4, scoped, tag = 'scoped memory for tpu_custom_call.1']
    #allocation5 [shape = 's32[1]{0}', space=sflag, size = 0x4, scoped, tag = 'scoped memory for tpu_custom_call.1']
    #allocation6 [shape = 'u8[32768]{0}', space=vmem, size = 0x8000, scoped, tag = 'input window, operand 1, single buffered']
    #allocation7 [shape = 's32[1]{0}', space=sflag, size = 0x4, scoped, tag = 'scoped memory for tpu_custom_call.1']
    #allocation8 [shape = 'u8[4096]{0}', space=vmem, size = 0x1000, scoped, tag = 'output window, operand 0, single buffered']
    %8 = vsyncpa [#allocation4], 0
    %9 = vsyncpa [#allocation7], 0
    %10 = vsyncpa [#allocation5], 0
    // Predicated region
    $region2: #{tpu_custom_call.1} parent=1 // pred_check
      _
    $region3: #{tpu_custom_call.1} parent=1 // pred_check_branch
      %12 = sbr.rel (0) target = $region5
    $region4: #{tpu_custom_call.1} parent=1 // pred_region
      %s14 = ssub.s32 128, 128
      %15 = vsyncadd [#allocation4], %s14
      %s16 = sshll.u32 [#allocation3], 4
      %s17 = int_to_ptr.vmem [resolvable:$true] %s16
      %22 = dma.hbm_to_vmem [thread:$0]  %s0, 128, %s17, [#allocation4], 64, 64, 4
    $region5: #{tpu_custom_call.1} parent=1 // pred_fallthru
      _
    // Predicated region
    $region6: #{tpu_custom_call.1} parent=1 // pred_check
      _
    $region7: #{tpu_custom_call.1} parent=1 // pred_check_branch
      %24 = sbr.rel (0) target = $region9
    $region8: #{tpu_custom_call.1} parent=1 // pred_region
      %s26 = ssub.s32 1024, 1024
      %27 = vsyncadd [#allocation7], %s26
      %s28 = sshll.u32 [#allocation6], 4
      %s29 = int_to_ptr.vmem [resolvable:$true] %s28
      %34 = dma.hbm_to_vmem [thread:$0]  %s1, 1024, %s29, [#allocation7], 64, 64, 4
    $region9: #{tpu_custom_call.1} parent=1 // pred_fallthru
      _
    // Predicated region
    $region10: #{tpu_custom_call.1} parent=1 // pred_check
      _
    $region11: #{tpu_custom_call.1} parent=1 // pred_check_branch
      %36 = sbr.rel (0) target = $region13
    $region12: #{tpu_custom_call.1} parent=1 // pred_region
      _
    $region13: #{tpu_custom_call.1} parent=1 // pred_fallthru
      _
    // Predicated region
    $region14: #{tpu_custom_call.1} parent=1 // pred_check
      _
    $region15: #{tpu_custom_call.1} parent=1 // pred_check_branch
      %38 = sbr.rel (0) target = $region17
    $region16: #{tpu_custom_call.1} parent=1 // pred_region
      %39 = dma.done [#allocation4], 128
    $region17: #{tpu_custom_call.1} parent=1 // pred_fallthru
      _
    // Predicated region
    $region18: #{tpu_custom_call.1} parent=1 // pred_check
      _
    $region19: #{tpu_custom_call.1} parent=1 // pred_check_branch
      %41 = sbr.rel (0) target = $region21
    $region20: #{tpu_custom_call.1} parent=1 // pred_region
      %42 = dma.done [#allocation7], 1024
    $region21: #{tpu_custom_call.1} parent=1 // pred_fallthru
      _
    %p44 = scmp.eq.s32.totalorder 0, 0
    // Predicated region
    $region22: #{tpu_custom_call.1} parent=1 // pred_check
      %p45 = pneg %p44
    $region23: #{tpu_custom_call.1} parent=1 // pred_check_branch
      %47 = sbr.rel (%p45) target = $region25
    $region24: #{tpu_custom_call.1} parent=1 // pred_region
      %48 = vst [vmem:[#allocation2] sm:$0xff] 0.0
      %49 = vst [vmem:[#allocation2 + $0x8] sm:$0xff] 0.0
    $region25: #{tpu_custom_call.1} parent=1 // pred_fallthru
      _
    %v50 = vld [vmem:[#allocation2] sm:$0xff]
    %v51 = vld [vmem:[#allocation2 + $0x8] sm:$0xff]
    %v52 = vld [vmem:[#allocation3] sm:$0xf]
    %v53 = vld [vmem:[#allocation3 + $0x4] sm:$0xf]
    %v54 = vld [vmem:[#allocation6] sm:$0xf]
    %v55 = vld [vmem:[#allocation6 + $0x4] sm:$0xf]
    %v56 = vld [vmem:[#allocation6 + $0x8] sm:$0xf]
    %v57 = vld [vmem:[#allocation6 + $0xc] sm:$0xf]
    %v58 = vld [vmem:[#allocation6 + $0x10] sm:$0xf]
    %v59 = vld [vmem:[#allocation6 + $0x14] sm:$0xf]
    %v60 = vld [vmem:[#allocation6 + $0x18] sm:$0xf]
    %v61 = vld [vmem:[#allocation6 + $0x1c] sm:$0xf]
    %v62 = vld [vmem:[#allocation6 + $0x20] sm:$0xf]
    %v63 = vld [vmem:[#allocation6 + $0x24] sm:$0xf]
    %v64 = vld [vmem:[#allocation6 + $0x28] sm:$0xf]
    %v65 = vld [vmem:[#allocation6 + $0x2c] sm:$0xf]
    %v66 = vld [vmem:[#allocation6 + $0x30] sm:$0xf]
    %v67 = vld [vmem:[#allocation6 + $0x34] sm:$0xf]
    %v68 = vld [vmem:[#allocation6 + $0x38] sm:$0xf]
    %v69 = vld [vmem:[#allocation6 + $0x3c] sm:$0xf]
    %v72 = vunpack.c.l.b16 %v52
    %v73 = vunpack.c.l.b16 %v53
    %v74 = vpack.c.b16 %v73, %v72
    %v92 = vunpack.c.l.b16 %v54
    %v93 = vunpack.c.l.b16 %v55
    %v94 = vunpack.c.l.b16 %v56
    %v95 = vunpack.c.l.b16 %v57
    %v96 = vunpack.c.l.b16 %v58
    %v97 = vunpack.c.l.b16 %v59
    %v98 = vunpack.c.l.b16 %v60
    %v99 = vunpack.c.l.b16 %v61
    %v100 = vunpack.c.l.b16 %v62
    %v101 = vunpack.c.l.b16 %v63
    %v102 = vunpack.c.l.b16 %v64
    %v103 = vunpack.c.l.b16 %v65
    %v104 = vunpack.c.l.b16 %v66
    %v105 = vunpack.c.l.b16 %v67
    %v106 = vunpack.c.l.b16 %v68
    %v107 = vunpack.c.l.b16 %v69
    %v108 = vpack.c.b16 %v93, %v92
    %v109 = vpack.c.b16 %v95, %v94
    %v110 = vpack.c.b16 %v97, %v96
    %v111 = vpack.c.b16 %v99, %v98
    %v112 = vpack.c.b16 %v101, %v100
    %v113 = vpack.c.b16 %v103, %v102
    %v114 = vpack.c.b16 %v105, %v104
    %v115 = vpack.c.b16 %v107, %v106
    %124 = vmatprep.subr.bf16.mxu0 0
    %125 = vmatpush1.bf16.msra.mxu0 %v108
    %126 = vmatprep.subr.bf16.mxu0 0
    %127 = vmatpush1.bf16.msra.mxu0 %v109
    %128 = vmatprep.subr.bf16.mxu0 0
    %129 = vmatpush1.bf16.msra.mxu0 %v110
    %130 = vmatprep.subr.bf16.mxu0 0
    %131 = vmatpush1.bf16.msra.mxu0 %v111
    %132 = vmatprep.subr.bf16.mxu0 0
    %133 = vmatpush1.bf16.msra.mxu0 %v112
    %134 = vmatprep.subr.bf16.mxu0 0
    %135 = vmatpush1.bf16.msra.mxu0 %v113
    %136 = vmatprep.subr.bf16.mxu0 0
    %137 = vmatpush1.bf16.msra.mxu0 %v114
    %138 = vmatprep.subr.bf16.mxu0 0
    %139 = vmatpush1.bf16.msra.mxu0 %v115
    %140 = vmatprep.subr.bf16.mxu0 0
    %141 = vmatpush1.bf16.msra.mxu0 0
    %142 = vmatprep.subr.bf16.mxu0 0
    %143 = vmatpush1.bf16.msra.mxu0 0
    %144 = vmatprep.subr.bf16.mxu0 0
    %145 = vmatpush1.bf16.msra.mxu0 0
    %146 = vmatprep.subr.bf16.mxu0 0
    %147 = vmatpush1.bf16.msra.mxu0 0
    %148 = vmatprep.subr.bf16.mxu0 0
    %149 = vmatpush1.bf16.msra.mxu0 0
    %150 = vmatprep.subr.bf16.mxu0 0
    %151 = vmatpush1.bf16.msra.mxu0 0
    %152 = vmatprep.subr.bf16.mxu0 0
    %153 = vmatpush1.bf16.msra.mxu0 0
    %154 = vmatprep.subr.bf16.mxu0 0
    %155 = vmatpush1.bf16.msra.mxu0 0
    %156 = vmatprep.mubr.bf16.mxu0 0
    %157 = vmatmul.mubr.bf16.gmra.mrb[0].mxu0 %v74
    %v158 = vpop.f32.mrb[0].mxu0
    %v159 = vadd.f32 0.0, %v158
    %v160 = vpop.f32.mrb[0].mxu0
    %v161 = vpop.f32.mrb[0].mxu0
    %v162 = vadd.f32 0.0, %v161
    %v163 = vpop.f32.mrb[0].mxu0
    %164 = vdwg.mxu0
    %v165 = vadd.f32 %v50, %v159
    %v166 = vadd.f32 %v51, %v162
    %167 = vst [vmem:[#allocation2] sm:$0xff] %v165
    %168 = vst [vmem:[#allocation2 + $0x8] sm:$0xff] %v166
    // Predicated region
    $region26: #{tpu_custom_call.1} parent=1 // pred_check
      %p169 = pneg %p44
    $region27: #{tpu_custom_call.1} parent=1 // pred_check_branch
      %171 = sbr.rel (%p169) target = $region29
    $region28: #{tpu_custom_call.1} parent=1 // pred_region
      %v172 = vld [vmem:[#allocation2] sm:$0xff]
      %v173 = vld [vmem:[#allocation2 + $0x8] sm:$0xff]
      %v174 = vld [vmem:[%s2] sm:$0x1]
      %v176 = vlaneseq
      %v177 = vshrl.u32 %v176, 7
      %v178 = vsub.s32 0, %v177
      %v179 = vrot.slane %v174, %v178
      %v181 = vadd.f32 %v172, %v179
      %v182 = vadd.f32 %v173, %v179
      %v183 = vtanh.pop %v181
      %v184 = vtanh.pop %v182
      %v185 = vpack.c.bf16 %v184, %v183
      %v187 = vunpack.c.l.b16 %v185
      %v188 = vunpack.c.h.b16 %v185
      %v189 = vpack.c.b16 %v187, %v187
      %v190 = vpack.c.b16 %v188, %v188
      %193 = vst [vmem:[#allocation8] sm:$0xf] %v189
      %194 = vst [vmem:[#allocation8 + $0x4] sm:$0xf] %v190
    $region29: #{tpu_custom_call.1} parent=1 // pred_fallthru
      _
    // Predicated region
    $region30: #{tpu_custom_call.1} parent=1 // pred_check
      _
    $region31: #{tpu_custom_call.1} parent=1 // pred_check_branch
      %196 = sbr.rel (0) target = $region33
    $region32: #{tpu_custom_call.1} parent=1 // pred_region
      %s198 = ssub.s32 128, 128
      %199 = vsyncadd [#allocation5], %s198
      %s200 = sshll.u32 [#allocation8], 4
      %s201 = int_to_ptr.vmem [resolvable:$true] %s200
      %206 = dma.vmem_to_hbm [thread:$0]  %s201, 128, %s3, [#allocation5], 64, 64, 4
    $region33: #{tpu_custom_call.1} parent=1 // pred_fallthru
      _
    // Predicated region
    $region34: #{tpu_custom_call.1} parent=1 // pred_check
      _
    $region35: #{tpu_custom_call.1} parent=1 // pred_check_branch
      %208 = sbr.rel (0) target = $region37
    $region36: #{tpu_custom_call.1} parent=1 // pred_region
      %209 = dma.done [#allocation5], 128
    $region37: #{tpu_custom_call.1} parent=1 // pred_fallthru
      _
    %210 = vsyncpa [#allocation4], 1
    %211 = vsyncpa [#allocation7], 1
    %212 = vsyncpa [#allocation5], 1

</llo_original>
